<compile_context>
chip_gen: v7x
topology: tpu7x:2x2x1
jax: 0.10.0
libtpu: 0.0.40
codegen_flags: <defaults>
</compile_context>

<pallas_src>
import functools
import math

import jax
import jax.numpy as jnp
from jax import lax
from jax.experimental import pallas as pl
from jax.experimental.pallas import tpu as pltpu


_BN_EPS = 1e-3
# Scoped VMEM request: <= 48 MiB is safe on v7x (64 MiB physical) and leaves
# ample headroom on v5e/v6e (128 MiB physical).
_VMEM_LIMIT = 48 * 1024 * 1024


def _round_up(x, m):
    return (x + m - 1) // m * m


# ---------------------------------------------------------------------------
# pass 1: BN batch statistics (per-channel sum and sum-of-squares of x @ W).
# Zero-padded rows contribute exactly zero, so no validity mask is needed.
# ---------------------------------------------------------------------------
def _stats_kernel(x_ref, w_ref, stats_ref):
    @pl.when(pl.program_id(0) == 0)
    def _init():
        stats_ref[...] = jnp.zeros_like(stats_ref)

    x = jnp.dot(x_ref[...], w_ref[...], preferred_element_type=jnp.float32)
    stats_ref[0:1, :] += jnp.sum(x, axis=0, keepdims=True)
    stats_ref[1:2, :] += jnp.sum(x * x, axis=0, keepdims=True)


# ---------------------------------------------------------------------------
# pass 2: linear (BN scale folded into W) + BN shift + PReLU, windowed
# segment sum (MXU) + vectorized segmented max, hybrid pooling finalized on
# the last grid step.  Requires points sorted by pillar id.
# ---------------------------------------------------------------------------
def _main_kernel(tid_smem, inv_row_ref, inv_col_ref, lastm_ref, x_ref, w_ref,
                 shift_ref, prelu_ref, cnt_ref, a_ref, *refs,
                 tile_n, wm, last_vfe):
    if last_vfe:
        hyb_ref, segsum_ref, segmax_ref = refs
        xout_ref = None
    else:
        xout_ref, hyb_ref, segsum_ref, segmax_ref = refs

    i = pl.program_id(0)

    @pl.when(i == 0)
    def _init():
        segsum_ref[...] = jnp.zeros_like(segsum_ref)
        segmax_ref[...] = jnp.full(segmax_ref.shape, -jnp.inf,
                                   segmax_ref.dtype)

    # Linear (BN scale pre-folded into W) + BN shift + PReLU.
    x = jnp.dot(x_ref[...], w_ref[...], preferred_element_type=jnp.float32)
    xn = x + shift_ref[...]
    x_act = jnp.where(xn > 0, xn, prelu_ref[...] * xn)        # (tile_n, U) f32

    if not last_vfe:
        xout_ref[...] = x_act

    # Points are sorted by pillar id, so this tile touches a contiguous
    # window of at most tile_n pillars starting at p_lo (8-aligned).
    p_lo = tid_smem[i]
    p_lo = pl.multiple_of((p_lo // 8) * 8, 8)

    ids_row = inv_row_ref[...]                                # (1, tile_n)
    rel = ids_row - p_lo                                      # in [0, wm)
    iota_w = lax.broadcasted_iota(jnp.int32, (wm, tile_n), 0)
    onehot = (iota_w == rel).astype(jnp.float32)              # (wm, tile_n)

    # Windowed segment sum on the MXU (f32 accumulate into the window).
    segsum_ref[pl.ds(p_lo, wm), :] += jnp.dot(
        onehot, x_act, preferred_element_type=jnp.float32)

    # Segment max: bidirectional segmented max scan over the sorted tile
    # (log2(tile_n) roll/compare/max steps, no serial per-point loop).  After
    # the scan every row holds the max of its whole run within the tile; the
    # per-run value is committed through a one-hot matmul (exactly one
    # selected row per run, marked by the wrapper-precomputed last-mask).
    ids_col = inv_col_ref[...]                                # (tile_n, 1)
    m = x_act
    off = 1
    while off < tile_n:
        for sh in (off, tile_n - off):
            m_sh = pltpu.roll(m, shift=sh, axis=0)
            id_sh = pltpu.roll(ids_col, shift=sh, axis=0)
            m = jnp.where(ids_col == id_sh, jnp.maximum(m, m_sh), m)
        off *= 2

    onehot_last = onehot * lastm_ref[...]                     # (wm, tile_n)
    cand = jnp.dot(onehot_last, m, preferred_element_type=jnp.float32)
    present = jnp.sum(onehot_last, axis=1, keepdims=True) > 0.0
    win = segmax_ref[pl.ds(p_lo, wm), :]
    segmax_ref[pl.ds(p_lo, wm), :] = jnp.where(
        present, jnp.maximum(win, cand), win)

    # Hybrid pooling once every tile has been accumulated.
    @pl.when(i == pl.num_programs(0) - 1)
    def _fin():
        counts = cnt_ref[...]                                 # (p_acc, 1)
        valid = counts > 0.0
        feat_mean = segsum_ref[...] / jnp.maximum(counts, 1.0)
        feat_max = jnp.where(valid, segmax_ref[...], 0.0)
        a = a_ref[...]                                        # sigmoid(alpha)
        hyb_ref[...] = jnp.where(
            valid, a * feat_max + (1.0 - a) * feat_mean, 0.0)


# ---------------------------------------------------------------------------
# wrapper
# ---------------------------------------------------------------------------
def pfn_layer(inputs, unq_inv, params, *, num_pillars, last_layer=False,
              tile_n=256, tile_stats=512):
    """PFNLayer forward. inputs: (N, C_in) f32, unq_inv: (N,) int32."""
    inputs = inputs.astype(jnp.float32)
    n, c_in = inputs.shape
    units = params["w"].shape[1]
    # bf16 MXU operands for the wide second-layer matmul (error << tolerance);
    # keep f32 for the tiny first-layer contraction to keep BN numerics tight.
    mm_dtype = jnp.bfloat16 if c_in >= 32 else jnp.float32

    # Sort points by pillar id (one XLA argsort) so equal ids are contiguous:
    # enables the vectorized segmented max and the pillar-windowed one-hot.
    unq_inv = unq_inv.astype(jnp.int32)
    order = jnp.argsort(unq_inv)
    inv_order = jnp.zeros((n,), jnp.int32).at[order].set(
        jnp.arange(n, dtype=jnp.int32))
    x_sorted = jnp.take(inputs, order, axis=0)
    ids_sorted = jnp.take(unq_inv, order, axis=0)

    n_pad = _round_up(n, math.lcm(tile_n, tile_stats))
    n_tiles = n_pad // tile_n
    x_p = jnp.pad(x_sorted, ((0, n_pad - n), (0, 0))).astype(mm_dtype)
    inv_p = jnp.pad(ids_sorted, (0, n_pad - n),
                    constant_values=num_pillars)              # padded -> dummy

    wm = tile_n + 8                              # pillar window per tile
    p_acc = _round_up(num_pillars + 1, 8) + wm   # accumulator rows (+window)

    inv_row = inv_p.reshape(1, n_pad)
    inv_col = inv_p.reshape(n_pad, 1)
    tile_ids = inv_p[::tile_n]                   # first pillar id of each tile
    # Per point: 1.0 iff it is the last point of its pillar within its tile.
    nxt = jnp.concatenate([inv_p[1:], jnp.full((1,), -1, jnp.int32)])
    pos = jnp.arange(n_pad, dtype=jnp.int32) % tile_n
    last_mask = jnp.logical_or(inv_p != nxt, pos == tile_n - 1)
    last_mask = last_mask.astype(jnp.float32).reshape(1, n_pad)

    w = params["w"].astype(jnp.float32)
    gamma = params["gamma"].reshape(-1).astype(jnp.float32)
    beta = params["beta"].reshape(-1).astype(jnp.float32)
    prelu = params["prelu"].reshape(1, units).astype(jnp.float32)
    a_sig = jax.nn.sigmoid(
        params["alpha"].reshape(()).astype(jnp.float32)).reshape(1, 1)

    # ----------------------- pass 1: BN batch statistics -------------------
    stats = pl.pallas_call(
        _stats_kernel,
        out_shape=jax.ShapeDtypeStruct((8, units), jnp.float32),
        grid=(n_pad // tile_stats,),
        in_specs=[pl.BlockSpec((tile_stats, c_in), lambda i: (i, 0)),
                  pl.BlockSpec((c_in, units), lambda i: (0, 0))],
        out_specs=pl.BlockSpec((8, units), lambda i: (0, 0)),
        compiler_params=pltpu.CompilerParams(
            dimension_semantics=("arbitrary",),
            vmem_limit_bytes=_VMEM_LIMIT),
    )(x_p, w.astype(mm_dtype))

    # Fold BatchNorm (batch stats) into an affine: scale folded into W, shift
    # as a bias.  Parameter/statistic-only math -> tiny wrapper-side XLA ops.
    mean = stats[0] / float(n)
    ex2 = stats[1] / float(n)
    var = jnp.maximum(ex2 - mean * mean, 0.0)
    scale = gamma * lax.rsqrt(var + _BN_EPS)
    shift = (beta - mean * scale).reshape(1, units)
    w_scaled = (w * scale[None, :]).astype(mm_dtype)

    # Per-pillar point counts depend only on the indices: precompute once.
    counts = jnp.zeros((p_acc, 1), jnp.float32).at[unq_inv].add(1.0)

    # -------------- pass 2: activations + segment reductions ---------------
    kern = functools.partial(_main_kernel, tile_n=tile_n, wm=wm,
                             last_vfe=last_layer)
    in_specs = [
        pl.BlockSpec((1, tile_n), lambda i, tid: (0, i)),      # pillar ids
        pl.BlockSpec((tile_n, 1), lambda i, tid: (i, 0)),      # ids (column)
        pl.BlockSpec((1, tile_n), lambda i, tid: (0, i)),      # last-in-run
        pl.BlockSpec((tile_n, c_in), lambda i, tid: (i, 0)),   # inputs
        pl.BlockSpec((c_in, units), lambda i, tid: (0, 0)),    # W * bn_scale
        pl.BlockSpec((1, units), lambda i, tid: (0, 0)),       # bn shift
        pl.BlockSpec((1, units), lambda i, tid: (0, 0)),       # prelu slope
        pl.BlockSpec((p_acc, 1), lambda i, tid: (0, 0)),       # counts
        pl.BlockSpec((1, 1), lambda i, tid: (0, 0)),           # sigmoid(alpha)
    ]
    scratch = [pltpu.VMEM((p_acc, units), jnp.float32),        # segment sums
               pltpu.VMEM((p_acc, units), jnp.float32)]        # segment max
    hyb_spec = pl.BlockSpec((p_acc, units), lambda i, tid: (0, 0))
    if last_layer:
        out_shape = jax.ShapeDtypeStruct((p_acc, units), jnp.float32)
        out_specs = hyb_spec
    else:
        out_shape = (jax.ShapeDtypeStruct((n_pad, units), jnp.float32),
                     jax.ShapeDtypeStruct((p_acc, units), jnp.float32))
        out_specs = (pl.BlockSpec((tile_n, units), lambda i, tid: (i, 0)),
                     hyb_spec)

    res = pl.pallas_call(
        kern,
        out_shape=out_shape,
        grid_spec=pltpu.PrefetchScalarGridSpec(
            num_scalar_prefetch=1, grid=(n_tiles,),
            in_specs=in_specs, out_specs=out_specs, scratch_shapes=scratch),
        compiler_params=pltpu.CompilerParams(
            dimension_semantics=("arbitrary",),
            vmem_limit_bytes=_VMEM_LIMIT),
    )(tile_ids, inv_row, inv_col, last_mask, x_p, w_scaled, shift, prelu,
      counts, a_sig)

    if last_layer:
        return res[:num_pillars]

    x_act_sorted, hyb = res
    # Undo the sort and gather the per-pillar hybrid feature per point.
    # Plain XLA gathers + concat (lane-dense (N, 2U) result) beat a serial
    # in-kernel gather, per the performance review.
    x_act = jnp.take(x_act_sorted[:n], inv_order, axis=0)
    gathered = jnp.take(hyb[:num_pillars], unq_inv, axis=0)
    return jnp.concatenate([x_act, gathered], axis=1)


# ---------------------------------------------------------------------------
# pure-JAX reference for validation
# ---------------------------------------------------------------------------
def _reference(inputs, unq_inv, params, *, num_pillars, last_layer=False):
    x = inputs @ params["w"]
    mean = jnp.mean(x, axis=0, keepdims=True)
    var = jnp.mean((x - mean) ** 2, axis=0, keepdims=True)
    x = (x - mean) / jnp.sqrt(var + _BN_EPS)
    x = x * params["gamma"].reshape(1, -1) + params["beta"].reshape(1, -1)
    x = jnp.where(x > 0, x, params["prelu"].reshape(1, -1) * x)
    u = x.shape[1]
    seg_sum = jnp.zeros((num_pillars, u), x.dtype).at[unq_inv].add(x)
    cnt = jnp.zeros((num_pillars, 1), x.dtype).at[unq_inv].add(1.0)
    feat_mean = seg_sum / cnt
    feat_max = jnp.full((num_pillars, u), -jnp.inf,
                        x.dtype).at[unq_inv].max(x)
    a = jax.nn.sigmoid(params["alpha"].reshape(()))
    hybrid = a * feat_max + (1.0 - a) * feat_mean
    if last_layer:
        return hybrid
    return jnp.concatenate([x, hybrid[unq_inv]], axis=1)


if __name__ == "__main__":
    key = jax.random.PRNGKey(0)
    N, P = 300, 23      # N not a tile multiple, P not a multiple of 8

    def make_params(k, c_in, units):
        k_w, k_g, k_b, k_p = jax.random.split(k, 4)
        return {
            # torch Linear stores (out, in); here W is already (in, out).
            "w": (jax.random.normal(k_w, (c_in, units), jnp.float32)
                  / jnp.sqrt(float(c_in))),
            "gamma": 1.0 + 0.1 * jax.random.normal(k_g, (units,), jnp.float32),
            "beta": 0.1 * jax.random.normal(k_b, (units,), jnp.float32),
            "prelu": 0.25 + 0.05 * jax.random.normal(k_p, (units,),
                                                     jnp.float32),
            "alpha": jnp.full((1, 1), 0.3, jnp.float32),
        }

    k_inv, k_perm, k_x1, k_x2, k_p1, k_p2 = jax.random.split(key, 6)
    # unq_inv is a torch.unique inverse index: every pillar occurs >= once.
    unq_inv = jnp.concatenate(
        [jnp.arange(P, dtype=jnp.int32),
         jax.random.randint(k_inv, (N - P,), 0, P, dtype=jnp.int32)])
    unq_inv = jax.random.permutation(k_perm, unq_inv)

    # PFNLayer(in_channels=10, out_channels=128, last_layer=False): units=64,
    # output (N, 128).
    x1 = jax.random.normal(k_x1, (N, 10), jnp.float32)
    prm1 = make_params(k_p1, 10, 64)
    out1 = jax.block_until_ready(
        pfn_layer(x1, unq_inv, prm1, num_pillars=P, last_layer=False))
    ref1 = _reference(x1, unq_inv, prm1, num_pillars=P, last_layer=False)
    assert out1.shape == ref1.shape, (out1.shape, ref1.shape)
    err1 = float(jnp.max(jnp.abs(out1 - ref1)))
    assert jnp.allclose(out1, ref1, atol=2e-2, rtol=2e-2), err1

    # PFNLayer(in_channels=64, out_channels=64, last_layer=True): units=64,
    # output (P, 64).
    x2 = jax.random.normal(k_x2, (N, 64), jnp.float32)
    prm2 = make_params(k_p2, 64, 64)
    out2 = jax.block_until_ready(
        pfn_layer(x2, unq_inv, prm2, num_pillars=P, last_layer=True))
    ref2 = _reference(x2, unq_inv, prm2, num_pillars=P, last_layer=True)
    assert out2.shape == ref2.shape, (out2.shape, ref2.shape)
    err2 = float(jnp.max(jnp.abs(out2 - ref2)))
    assert jnp.allclose(out2, ref2, atol=2e-2, rtol=2e-2), err2

    print("KERNEL_OK")
</pallas_src>

<mosaic_0001>
module attributes {stable_mosaic.version = 11 : i64} {
  func.func @_stats_kernel(%arg0: i32, %arg1: memref<512x10xf32, #tpu.memory_space<vmem>>, %arg2: memref<10x64xf32, #tpu.memory_space<vmem>>, %arg3: memref<8x64xf32, #tpu.memory_space<vmem>>) attributes {dimension_semantics = [#tpu.dimension_semantics<arbitrary>], iteration_bounds = array<i64: 1>, scalar_prefetch = 0 : i64, scratch_operands = 0 : i64, tpu.core_type = #tpu.core_type<tc>, window_params = [{transform_indices = @transform_0, window_bounds = array<i64: 512, 10>}, {pipeline_mode = #tpu.pipeline_mode<synchronous>, transform_indices = @transform_1, window_bounds = array<i64: 10, 64>}, {pipeline_mode = #tpu.pipeline_mode<synchronous>, transform_indices = @transform_2, window_bounds = array<i64: 8, 64>}]} {
    %c0_i32 = arith.constant 0 : i32
    %0 = arith.cmpi eq, %arg0, %c0_i32 : i32
    %1 = arith.extui %0 : i1 to i32
    %c0_i32_0 = arith.constant 0 : i32
    %2 = arith.cmpi ne, %1, %c0_i32_0 : i32
    scf.if %2 {
      %cst_13 = arith.constant 0.000000e+00 : f32
      %17 = vector.broadcast %cst_13 : f32 to vector<8x64xf32>
      %c0_14 = arith.constant 0 : index
      %c0_15 = arith.constant 0 : index
      %18 = vector.load %arg3[%c0_14, %c0_15] : memref<8x64xf32, #tpu.memory_space<vmem>>, vector<8x64xf32>
      tpu.vector_store %arg3[%c0_14, %c0_15], %17 {strides = array<i32>} : memref<8x64xf32, #tpu.memory_space<vmem>>, vector<8x64xf32>,
    } else {
    }
    %c0 = arith.constant 0 : index
    %c0_1 = arith.constant 0 : index
    %3 = vector.load %arg1[%c0, %c0_1] : memref<512x10xf32, #tpu.memory_space<vmem>>, vector<512x10xf32>
    %c0_2 = arith.constant 0 : index
    %c0_3 = arith.constant 0 : index
    %4 = vector.load %arg2[%c0_2, %c0_3] : memref<10x64xf32, #tpu.memory_space<vmem>>, vector<10x64xf32>
    %cst = arith.constant dense<0.000000e+00> : vector<512x64xf32>
    %5 = tpu.matmul %3, %4, %cst {dimension_numbers = #tpu.dot_dimension_numbers<[1], [0], [0], [1], [0, 0, 1, 1], [], []>} : vector<512x10xf32>, vector<10x64xf32>, vector<512x64xf32> -> vector<512x64xf32>
    %c0_4 = arith.constant 0 : index
    %c0_5 = arith.constant 0 : index
    %6 = vector.load %arg3[%c0_4, %c0_5] : memref<8x64xf32, #tpu.memory_space<vmem>>, vector<1x64xf32>
    %cst_6 = arith.constant dense<0.000000e+00> : vector<64xf32>
    %7 = vector.multi_reduction <add>, %5, %cst_6 [0] : vector<512x64xf32> to vector<64xf32>
    %8 = vector.shape_cast %7 : vector<64xf32> to vector<1x64xf32>
    %9 = arith.addf %6, %8 : vector<1x64xf32>
    %c0_7 = arith.constant 0 : index
    %c0_8 = arith.constant 0 : index
    %10 = vector.load %arg3[%c0_7, %c0_8] : memref<8x64xf32, #tpu.memory_space<vmem>>, vector<1x64xf32>
    tpu.vector_store %arg3[%c0_7, %c0_8], %9 {strides = array<i32>} : memref<8x64xf32, #tpu.memory_space<vmem>>, vector<1x64xf32>,
    %c1 = arith.constant 1 : index
    %c0_9 = arith.constant 0 : index
    %11 = vector.load %arg3[%c1, %c0_9] : memref<8x64xf32, #tpu.memory_space<vmem>>, vector<1x64xf32>
    %12 = arith.mulf %5, %5 : vector<512x64xf32>
    %cst_10 = arith.constant dense<0.000000e+00> : vector<64xf32>
    %13 = vector.multi_reduction <add>, %12, %cst_10 [0] : vector<512x64xf32> to vector<64xf32>
    %14 = vector.shape_cast %13 : vector<64xf32> to vector<1x64xf32>
    %15 = arith.addf %11, %14 : vector<1x64xf32>
    %c1_11 = arith.constant 1 : index
    %c0_12 = arith.constant 0 : index
    %16 = vector.load %arg3[%c1_11, %c0_12] : memref<8x64xf32, #tpu.memory_space<vmem>>, vector<1x64xf32>
    tpu.vector_store %arg3[%c1_11, %c0_12], %15 {strides = array<i32>} : memref<8x64xf32, #tpu.memory_space<vmem>>, vector<1x64xf32>,
    return
  }
  func.func @transform_0(%arg0: i32) -> (i32, i32) {
    %c0_i32 = arith.constant 0 : i32
    %c0_i32_0 = arith.constant 0 : i32
    return %arg0, %c0_i32 : i32, i32
  }
  func.func @transform_1(%arg0: i32) -> (i32, i32) {
    %c0_i32 = arith.constant 0 : i32
    %c0_i32_0 = arith.constant 0 : i32
    %c0_i32_1 = arith.constant 0 : i32
    return %c0_i32, %c0_i32_0 : i32, i32
  }
  func.func @transform_2(%arg0: i32) -> (i32, i32) {
    %c0_i32 = arith.constant 0 : i32
    %c0_i32_0 = arith.constant 0 : i32
    %c0_i32_1 = arith.constant 0 : i32
    return %c0_i32, %c0_i32_0 : i32, i32
  }
}

</mosaic_0001>

<llo_original>
// kernel: tpu_custom_call.1
$region0: #{tpu_custom_call.1}
  #allocation0 [shape = 'u32[]', space=smem, size = 0x4, offset = 0x4, fixed_abs, tag = 'smem constant byte address 0x4 - core index']
  #allocation1 [shape = 'u32[144,128]{1,0:T(1,128)}', space=vmem, size = 0x12000, scoped, tag = 'internal scratch']
  %s0 = inlined_call_operand.vmem [shape: f32[512,10], index: 0, kind: input, shape index: {}]
  %s1 = inlined_call_operand.vmem [shape: f32[10,64], index: 1, kind: input, shape index: {}]
  %s2 = inlined_call_operand.hbm [shape: f32[8,64], index: 2, kind: output, shape index: {}]
  %s3 = sld [smem:[#allocation0]]
  $region22: #{tpu_custom_call.1} parent=0
    _
  %s5 = ssub.s32 1, %s3
  %s6 = scalar_select 0, %s5, %s3
  $region1: #{tpu_custom_call.1} parent=0
    #allocation2 [shape = 'u8[4096]{0}', space=vmem, size = 0x1000, scoped, tag = 'output window, operand 0, single buffered']
    #allocation3 [shape = 's32[1]{0}', space=sflag, size = 0x4, scoped, tag = 'scoped memory for tpu_custom_call.1']
    %7 = vsyncpa [#allocation3], 0
    // Predicated region
    $region2: #{tpu_custom_call.1} parent=1 // pred_check
      _
    $region3: #{tpu_custom_call.1} parent=1 // pred_check_branch
      %9 = sbr.rel (0) target = $region5
    $region4: #{tpu_custom_call.1} parent=1 // pred_region
      _
    $region5: #{tpu_custom_call.1} parent=1 // pred_fallthru
      _
    // Predicated region
    $region6: #{tpu_custom_call.1} parent=1 // pred_check
      _
    $region7: #{tpu_custom_call.1} parent=1 // pred_check_branch
      %11 = sbr.rel (0) target = $region9
    $region8: #{tpu_custom_call.1} parent=1 // pred_region
      _
    $region9: #{tpu_custom_call.1} parent=1 // pred_fallthru
      _
    %p12 = scmp.eq.s32.totalorder 0, 0
    // Predicated region
    $region10: #{tpu_custom_call.1} parent=1 // pred_check
      %p13 = pneg %p12
    $region11: #{tpu_custom_call.1} parent=1 // pred_check_branch
      %15 = sbr.rel (%p13) target = $region13
    $region12: #{tpu_custom_call.1} parent=1 // pred_region
      %vm16 = vcmask 523264
      %17 = vst.msk [vmem:[#allocation2] sm:$0xff] %vm16, 0.0
    $region13: #{tpu_custom_call.1} parent=1 // pred_fallthru
      _
    %v18 = vld [vmem:[%s0] sm:$0xff]
    %v19 = vld [vmem:[%s0 + $0x8] sm:$0xff]
    %v20 = vld [vmem:[%s0 + $0x10] sm:$0xff]
    %v21 = vld [vmem:[%s0 + $0x18] sm:$0xff]
    %v22 = vld [vmem:[%s0 + $0x20] sm:$0xff]
    %v23 = vld [vmem:[%s0 + $0x28] sm:$0xff]
    %v24 = vld [vmem:[%s0 + $0x30] sm:$0xff]
    %v25 = vld [vmem:[%s0 + $0x38] sm:$0xff]
    %v26 = vld [vmem:[%s0 + $0x40] sm:$0xff]
    %v27 = vld [vmem:[%s0 + $0x48] sm:$0xff]
    %v28 = vld [vmem:[%s0 + $0x50] sm:$0xff]
    %v29 = vld [vmem:[%s0 + $0x58] sm:$0xff]
    %v30 = vld [vmem:[%s0 + $0x60] sm:$0xff]
    %v31 = vld [vmem:[%s0 + $0x68] sm:$0xff]
    %v32 = vld [vmem:[%s0 + $0x70] sm:$0xff]
    %v33 = vld [vmem:[%s0 + $0x78] sm:$0xff]
    %v34 = vld [vmem:[%s0 + $0x80] sm:$0xff]
    %v35 = vld [vmem:[%s0 + $0x88] sm:$0xff]
    %v36 = vld [vmem:[%s0 + $0x90] sm:$0xff]
    %v37 = vld [vmem:[%s0 + $0x98] sm:$0xff]
    %v38 = vld [vmem:[%s0 + $0xa0] sm:$0xff]
    %v39 = vld [vmem:[%s0 + $0xa8] sm:$0xff]
    %v40 = vld [vmem:[%s0 + $0xb0] sm:$0xff]
    %v41 = vld [vmem:[%s0 + $0xb8] sm:$0xff]
    %v42 = vld [vmem:[%s0 + $0xc0] sm:$0xff]
    %v43 = vld [vmem:[%s0 + $0xc8] sm:$0xff]
    %v44 = vld [vmem:[%s0 + $0xd0] sm:$0xff]
    %v45 = vld [vmem:[%s0 + $0xd8] sm:$0xff]
    %v46 = vld [vmem:[%s0 + $0xe0] sm:$0xff]
    %v47 = vld [vmem:[%s0 + $0xe8] sm:$0xff]
    %v48 = vld [vmem:[%s0 + $0xf0] sm:$0xff]
    %v49 = vld [vmem:[%s0 + $0xf8] sm:$0xff]
    %v50 = vld [vmem:[%s0 + $0x100] sm:$0xff]
    %v51 = vld [vmem:[%s0 + $0x108] sm:$0xff]
    %v52 = vld [vmem:[%s0 + $0x110] sm:$0xff]
    %v53 = vld [vmem:[%s0 + $0x118] sm:$0xff]
    %v54 = vld [vmem:[%s0 + $0x120] sm:$0xff]
    %v55 = vld [vmem:[%s0 + $0x128] sm:$0xff]
    %v56 = vld [vmem:[%s0 + $0x130] sm:$0xff]
    %v57 = vld [vmem:[%s0 + $0x138] sm:$0xff]
    %v58 = vld [vmem:[%s0 + $0x140] sm:$0xff]
    %v59 = vld [vmem:[%s0 + $0x148] sm:$0xff]
    %v60 = vld [vmem:[%s0 + $0x150] sm:$0xff]
    %v61 = vld [vmem:[%s0 + $0x158] sm:$0xff]
    %v62 = vld [vmem:[%s0 + $0x160] sm:$0xff]
    %v63 = vld [vmem:[%s0 + $0x168] sm:$0xff]
    %v64 = vld [vmem:[%s0 + $0x170] sm:$0xff]
    %v65 = vld [vmem:[%s0 + $0x178] sm:$0xff]
    %v66 = vld [vmem:[%s0 + $0x180] sm:$0xff]
    %v67 = vld [vmem:[%s0 + $0x188] sm:$0xff]
    %v68 = vld [vmem:[%s0 + $0x190] sm:$0xff]
    %v69 = vld [vmem:[%s0 + $0x198] sm:$0xff]
    %v70 = vld [vmem:[%s0 + $0x1a0] sm:$0xff]
    %v71 = vld [vmem:[%s0 + $0x1a8] sm:$0xff]
    %v72 = vld [vmem:[%s0 + $0x1b0] sm:$0xff]
    %v73 = vld [vmem:[%s0 + $0x1b8] sm:$0xff]
    %v74 = vld [vmem:[%s0 + $0x1c0] sm:$0xff]
    %v75 = vld [vmem:[%s0 + $0x1c8] sm:$0xff]
    %v76 = vld [vmem:[%s0 + $0x1d0] sm:$0xff]
    %v77 = vld [vmem:[%s0 + $0x1d8] sm:$0xff]
    %v78 = vld [vmem:[%s0 + $0x1e0] sm:$0xff]
    %v79 = vld [vmem:[%s0 + $0x1e8] sm:$0xff]
    %v80 = vld [vmem:[%s0 + $0x1f0] sm:$0xff]
    %v81 = vld [vmem:[%s0 + $0x1f8] sm:$0xff]
    %v82 = vld [vmem:[%s1] sm:$0xff]
    %v83 = vld [vmem:[%s1 + $0x8] sm:$0x3]
    %vm84 = vcmask 80896
    %v86 = vsel %vm84, %v18, 0
    %v89 = vsel %vm84, %v19, 0
    %v92 = vsel %vm84, %v20, 0
    %v95 = vsel %vm84, %v21, 0
    %v98 = vsel %vm84, %v22, 0
    %v101 = vsel %vm84, %v23, 0
    %v104 = vsel %vm84, %v24, 0
    %v107 = vsel %vm84, %v25, 0
    %v110 = vsel %vm84, %v26, 0
    %v113 = vsel %vm84, %v27, 0
    %v116 = vsel %vm84, %v28, 0
    %v119 = vsel %vm84, %v29, 0
    %v122 = vsel %vm84, %v30, 0
    %v125 = vsel %vm84, %v31, 0
    %v128 = vsel %vm84, %v32, 0
    %v131 = vsel %vm84, %v33, 0
    %v134 = vsel %vm84, %v34, 0
    %v137 = vsel %vm84, %v35, 0
    %v140 = vsel %vm84, %v36, 0
    %v143 = vsel %vm84, %v37, 0
    %v146 = vsel %vm84, %v38, 0
    %v149 = vsel %vm84, %v39, 0
    %v152 = vsel %vm84, %v40, 0
    %v155 = vsel %vm84, %v41, 0
    %v158 = vsel %vm84, %v42, 0
    %v161 = vsel %vm84, %v43, 0
    %v164 = vsel %vm84, %v44, 0
    %v167 = vsel %vm84, %v45, 0
    %v170 = vsel %vm84, %v46, 0
    %v173 = vsel %vm84, %v47, 0
    %v176 = vsel %vm84, %v48, 0
    %v179 = vsel %vm84, %v49, 0
    %v182 = vsel %vm84, %v50, 0
    %v185 = vsel %vm84, %v51, 0
    %v188 = vsel %vm84, %v52, 0
    %v191 = vsel %vm84, %v53, 0
    %v194 = vsel %vm84, %v54, 0
    %v197 = vsel %vm84, %v55, 0
    %v200 = vsel %vm84, %v56, 0
    %v203 = vsel %vm84, %v57, 0
    %v206 = vsel %vm84, %v58, 0
    %v209 = vsel %vm84, %v59, 0
    %v212 = vsel %vm84, %v60, 0
    %v215 = vsel %vm84, %v61, 0
    %v218 = vsel %vm84, %v62, 0
    %v221 = vsel %vm84, %v63, 0
    %v224 = vsel %vm84, %v64, 0
    %v227 = vsel %vm84, %v65, 0
    %v230 = vsel %vm84, %v66, 0
    %v233 = vsel %vm84, %v67, 0
    %v236 = vsel %vm84, %v68, 0
    %v239 = vsel %vm84, %v69, 0
    %v242 = vsel %vm84, %v70, 0
    %v245 = vsel %vm84, %v71, 0
    %v248 = vsel %vm84, %v72, 0
    %v251 = vsel %vm84, %v73, 0
    %v254 = vsel %vm84, %v74, 0
    %v257 = vsel %vm84, %v75, 0
    %v260 = vsel %vm84, %v76, 0
    %v263 = vsel %vm84, %v77, 0
    %v266 = vsel %vm84, %v78, 0
    %v269 = vsel %vm84, %v79, 0
    %v272 = vsel %vm84, %v80, 0
    %v275 = vsel %vm84, %v81, 0
    %vm277 = vcmask 1041408
    %v279 = vsel %vm277, %v83, 0
    %281 = vmatprep.subr.mxu0 0.0
    %282 = vmatpush1.msra.mxu0 %v82
    %283 = vmatprep.subr.mxu0 0.0
    %284 = vmatpush1.msra.mxu0 %v279
    %285 = vmatprep.subr.mxu0 0.0
    %286 = vmatpush1.msra.mxu0 0.0
    %287 = vmatprep.subr.mxu0 0.0
    %288 = vmatpush1.msra.mxu0 0.0
    %289 = vmatprep.subr.mxu0 0.0
    %290 = vmatpush1.msra.mxu0 0.0
    %291 = vmatprep.subr.mxu0 0.0
    %292 = vmatpush1.msra.mxu0 0.0
    %293 = vmatprep.subr.mxu0 0.0
    %294 = vmatpush1.msra.mxu0 0.0
    %295 = vmatprep.subr.mxu0 0.0
    %296 = vmatpush1.msra.mxu0 0.0
    %297 = vmatprep.subr.mxu0 0.0
    %298 = vmatpush1.msra.mxu0 0.0
    %299 = vmatprep.subr.mxu0 0.0
    %300 = vmatpush1.msra.mxu0 0.0
    %301 = vmatprep.subr.mxu0 0.0
    %302 = vmatpush1.msra.mxu0 0.0
    %303 = vmatprep.subr.mxu0 0.0
    %304 = vmatpush1.msra.mxu0 0.0
    %305 = vmatprep.subr.mxu0 0.0
    %306 = vmatpush1.msra.mxu0 0.0
    %307 = vmatprep.subr.mxu0 0.0
    %308 = vmatpush1.msra.mxu0 0.0
    %309 = vmatprep.subr.mxu0 0.0
    %310 = vmatpush1.msra.mxu0 0.0
    %311 = vmatprep.subr.mxu0 0.0
    %312 = vmatpush1.msra.mxu0 0.0
    %313 = vmatprep.subr.mxu0 0.0
    %314 = vmatpush1.msra.mxu0 0.0
    %315 = vmatprep.subr.mxu0 0.0
    %316 = vmatpush1.msra.mxu0 0.0
    %317 = vmatprep.subr.mxu0 0.0
    %318 = vmatpush1.msra.mxu0 0.0
    %319 = vmatprep.subr.mxu0 0.0
    %320 = vmatpush1.msra.mxu0 0.0
    %321 = vmatprep.subr.mxu0 0.0
    %322 = vmatpush1.msra.mxu0 0.0
    %323 = vmatprep.subr.mxu0 0.0
    %324 = vmatpush1.msra.mxu0 0.0
    %325 = vmatprep.subr.mxu0 0.0
    %326 = vmatpush1.msra.mxu0 0.0
    %327 = vmatprep.subr.mxu0 0.0
    %328 = vmatpush1.msra.mxu0 0.0
    %329 = vmatprep.subr.mxu0 0.0
    %330 = vmatpush1.msra.mxu0 0.0
    %331 = vmatprep.subr.mxu0 0.0
    %332 = vmatpush1.msra.mxu0 0.0
    %333 = vmatprep.subr.mxu0 0.0
    %334 = vmatpush1.msra.mxu0 0.0
    %335 = vmatprep.subr.mxu0 0.0
    %336 = vmatpush1.msra.mxu0 0.0
    %337 = vmatprep.subr.mxu0 0.0
    %338 = vmatpush1.msra.mxu0 0.0
    %339 = vmatprep.subr.mxu0 0.0
    %340 = vmatpush1.msra.mxu0 0.0
    %341 = vmatprep.subr.mxu0 0.0
    %342 = vmatpush1.msra.mxu0 0.0
    %343 = vmatprep.subr.mxu0 0.0
    %344 = vmatpush1.msra.mxu0 0.0
    %345 = vmatprep.mubr.f32.mxu0 0.0
    %346 = vmatmul.mubr.f32.gmra.mrb[0].mxu0 %v86
    %v347 = vpop.f32.mrb[0].mxu0
    %v348 = vadd.f32 0.0, %v347
    %v349 = vpop.f32.mrb[0].mxu0
    %350 = vmatprep.mubr.f32.mxu0 0.0
    %351 = vmatmul.mubr.f32.gmra.mrb[0].mxu0 %v89
    %v352 = vpop.f32.mrb[0].mxu0
    %v353 = vadd.f32 0.0, %v352
    %v354 = vpop.f32.mrb[0].mxu0
    %355 = vmatprep.mubr.f32.mxu0 0.0
    %356 = vmatmul.mubr.f32.gmra.mrb[0].mxu0 %v92
    %v357 = vpop.f32.mrb[0].mxu0
    %v358 = vadd.f32 0.0, %v357
    %v359 = vpop.f32.mrb[0].mxu0
    %360 = vmatprep.mubr.f32.mxu0 0.0
    %361 = vmatmul.mubr.f32.gmra.mrb[0].mxu0 %v95
    %v362 = vpop.f32.mrb[0].mxu0
    %v363 = vadd.f32 0.0, %v362
    %v364 = vpop.f32.mrb[0].mxu0
    %365 = vmatprep.mubr.f32.mxu0 0.0
    %366 = vmatmul.mubr.f32.gmra.mrb[0].mxu0 %v98
    %v367 = vpop.f32.mrb[0].mxu0
    %v368 = vadd.f32 0.0, %v367
    %v369 = vpop.f32.mrb[0].mxu0
    %370 = vmatprep.mubr.f32.mxu0 0.0
    %371 = vmatmul.mubr.f32.gmra.mrb[0].mxu0 %v101
    %v372 = vpop.f32.mrb[0].mxu0
    %v373 = vadd.f32 0.0, %v372
    %v374 = vpop.f32.mrb[0].mxu0
    %375 = vmatprep.mubr.f32.mxu0 0.0
    %376 = vmatmul.mubr.f32.gmra.mrb[0].mxu0 %v104
    %v377 = vpop.f32.mrb[0].mxu0
    %v378 = vadd.f32 0.0, %v377
    %v379 = vpop.f32.mrb[0].mxu0
    %380 = vmatprep.mubr.f32.mxu0 0.0
    %381 = vmatmul.mubr.f32.gmra.mrb[0].mxu0 %v107
    %v382 = vpop.f32.mrb[0].mxu0
    %v383 = vadd.f32 0.0, %v382
    %v384 = vpop.f32.mrb[0].mxu0
    %385 = vmatprep.mubr.f32.mxu0 0.0
    %386 = vmatmul.mubr.f32.gmra.mrb[0].mxu0 %v110
    %v387 = vpop.f32.mrb[0].mxu0
    %v388 = vadd.f32 0.0, %v387
    %v389 = vpop.f32.mrb[0].mxu0
    %390 = vmatprep.mubr.f32.mxu0 0.0
    %391 = vmatmul.mubr.f32.gmra.mrb[0].mxu0 %v113
    %v392 = vpop.f32.mrb[0].mxu0
    %v393 = vadd.f32 0.0, %v392
    %v394 = vpop.f32.mrb[0].mxu0
    %395 = vmatprep.mubr.f32.mxu0 0.0
    %396 = vmatmul.mubr.f32.gmra.mrb[0].mxu0 %v116
    %v397 = vpop.f32.mrb[0].mxu0
    %v398 = vadd.f32 0.0, %v397
    %v399 = vpop.f32.mrb[0].mxu0
    %400 = vmatprep.mubr.f32.mxu0 0.0
    %401 = vmatmul.mubr.f32.gmra.mrb[0].mxu0 %v119
    %v402 = vpop.f32.mrb[0].mxu0
    %v403 = vadd.f32 0.0, %v402
    %v404 = vpop.f32.mrb[0].mxu0
    %405 = vmatprep.mubr.f32.mxu0 0.0
    %406 = vmatmul.mubr.f32.gmra.mrb[0].mxu0 %v122
    %v407 = vpop.f32.mrb[0].mxu0
    %v408 = vadd.f32 0.0, %v407
    %v409 = vpop.f32.mrb[0].mxu0
    %410 = vmatprep.mubr.f32.mxu0 0.0
    %411 = vmatmul.mubr.f32.gmra.mrb[0].mxu0 %v125
    %v412 = vpop.f32.mrb[0].mxu0
    %v413 = vadd.f32 0.0, %v412
    %v414 = vpop.f32.mrb[0].mxu0
    %415 = vmatprep.mubr.f32.mxu0 0.0
    %416 = vmatmul.mubr.f32.gmra.mrb[0].mxu0 %v128
    %v417 = vpop.f32.mrb[0].mxu0
    %v418 = vadd.f32 0.0, %v417
    %v419 = vpop.f32.mrb[0].mxu0
    %420 = vmatprep.mubr.f32.mxu0 0.0
    %421 = vmatmul.mubr.f32.gmra.mrb[0].mxu0 %v131
    %v422 = vpop.f32.mrb[0].mxu0
    %v423 = vadd.f32 0.0, %v422
    %v424 = vpop.f32.mrb[0].mxu0
    %425 = vmatprep.mubr.f32.mxu0 0.0
    %426 = vmatmul.mubr.f32.gmra.mrb[0].mxu0 %v134
    %v427 = vpop.f32.mrb[0].mxu0
    %v428 = vadd.f32 0.0, %v427
    %v429 = vpop.f32.mrb[0].mxu0
    %430 = vmatprep.mubr.f32.mxu0 0.0
    %431 = vmatmul.mubr.f32.gmra.mrb[0].mxu0 %v137
    %v432 = vpop.f32.mrb[0].mxu0
    %v433 = vadd.f32 0.0, %v432
    %v434 = vpop.f32.mrb[0].mxu0
    %435 = vmatprep.mubr.f32.mxu0 0.0
    %436 = vmatmul.mubr.f32.gmra.mrb[0].mxu0 %v140
    %v437 = vpop.f32.mrb[0].mxu0
    %v438 = vadd.f32 0.0, %v437
    %v439 = vpop.f32.mrb[0].mxu0
    %440 = vmatprep.mubr.f32.mxu0 0.0
    %441 = vmatmul.mubr.f32.gmra.mrb[0].mxu0 %v143
    %v442 = vpop.f32.mrb[0].mxu0
    %v443 = vadd.f32 0.0, %v442
    %v444 = vpop.f32.mrb[0].mxu0
    %445 = vmatprep.mubr.f32.mxu0 0.0
    %446 = vmatmul.mubr.f32.gmra.mrb[0].mxu0 %v146
    %v447 = vpop.f32.mrb[0].mxu0
    %v448 = vadd.f32 0.0, %v447
    %v449 = vpop.f32.mrb[0].mxu0
    %450 = vmatprep.mubr.f32.mxu0 0.0
    %451 = vmatmul.mubr.f32.gmra.mrb[0].mxu0 %v149
    %v452 = vpop.f32.mrb[0].mxu0
    %v453 = vadd.f32 0.0, %v452
    %v454 = vpop.f32.mrb[0].mxu0
    %455 = vmatprep.mubr.f32.mxu0 0.0
    %456 = vmatmul.mubr.f32.gmra.mrb[0].mxu0 %v152
    %v457 = vpop.f32.mrb[0].mxu0
    %v458 = vadd.f32 0.0, %v457
    %v459 = vpop.f32.mrb[0].mxu0
    %460 = vmatprep.mubr.f32.mxu0 0.0
    %461 = vmatmul.mubr.f32.gmra.mrb[0].mxu0 %v155
    %v462 = vpop.f32.mrb[0].mxu0
    %v463 = vadd.f32 0.0, %v462
    %v464 = vpop.f32.mrb[0].mxu0
    %465 = vmatprep.mubr.f32.mxu0 0.0
    %466 = vmatmul.mubr.f32.gmra.mrb[0].mxu0 %v158
    %v467 = vpop.f32.mrb[0].mxu0
    %v468 = vadd.f32 0.0, %v467
    %v469 = vpop.f32.mrb[0].mxu0
    %470 = vmatprep.mubr.f32.mxu0 0.0
    %471 = vmatmul.mubr.f32.gmra.mrb[0].mxu0 %v161
    %v472 = vpop.f32.mrb[0].mxu0
    %v473 = vadd.f32 0.0, %v472
    %v474 = vpop.f32.mrb[0].mxu0
    %475 = vmatprep.mubr.f32.mxu0 0.0
    %476 = vmatmul.mubr.f32.gmra.mrb[0].mxu0 %v164
    %v477 = vpop.f32.mrb[0].mxu0
    %v478 = vadd.f32 0.0, %v477
    %v479 = vpop.f32.mrb[0].mxu0
    %480 = vmatprep.mubr.f32.mxu0 0.0
    %481 = vmatmul.mubr.f32.gmra.mrb[0].mxu0 %v167
    %v482 = vpop.f32.mrb[0].mxu0
    %v483 = vadd.f32 0.0, %v482
    %v484 = vpop.f32.mrb[0].mxu0
    %485 = vmatprep.mubr.f32.mxu0 0.0
    %486 = vmatmul.mubr.f32.gmra.mrb[0].mxu0 %v170
    %v487 = vpop.f32.mrb[0].mxu0
    %v488 = vadd.f32 0.0, %v487
    %v489 = vpop.f32.mrb[0].mxu0
    %490 = vmatprep.mubr.f32.mxu0 0.0
    %491 = vmatmul.mubr.f32.gmra.mrb[0].mxu0 %v173
    %v492 = vpop.f32.mrb[0].mxu0
    %v493 = vadd.f32 0.0, %v492
    %v494 = vpop.f32.mrb[0].mxu0
    %495 = vmatprep.mubr.f32.mxu0 0.0
    %496 = vmatmul.mubr.f32.gmra.mrb[0].mxu0 %v176
    %v497 = vpop.f32.mrb[0].mxu0
    %v498 = vadd.f32 0.0, %v497
    %v499 = vpop.f32.mrb[0].mxu0
    %500 = vmatprep.mubr.f32.mxu0 0.0
    %501 = vmatmul.mubr.f32.gmra.mrb[0].mxu0 %v179
    %v502 = vpop.f32.mrb[0].mxu0
    %v503 = vadd.f32 0.0, %v502
    %v504 = vpop.f32.mrb[0].mxu0
    %505 = vmatprep.mubr.f32.mxu0 0.0
    %506 = vmatmul.mubr.f32.gmra.mrb[0].mxu0 %v182
    %v507 = vpop.f32.mrb[0].mxu0
    %v508 = vadd.f32 0.0, %v507
    %v509 = vpop.f32.mrb[0].mxu0
    %510 = vmatprep.mubr.f32.mxu0 0.0
    %511 = vmatmul.mubr.f32.gmra.mrb[0].mxu0 %v185
    %v512 = vpop.f32.mrb[0].mxu0
    %v513 = vadd.f32 0.0, %v512
    %v514 = vpop.f32.mrb[0].mxu0
    %515 = vmatprep.mubr.f32.mxu0 0.0
    %516 = vmatmul.mubr.f32.gmra.mrb[0].mxu0 %v188
    %v517 = vpop.f32.mrb[0].mxu0
    %v518 = vadd.f32 0.0, %v517
    %v519 = vpop.f32.mrb[0].mxu0
    %520 = vmatprep.mubr.f32.mxu0 0.0
    %521 = vmatmul.mubr.f32.gmra.mrb[0].mxu0 %v191
    %v522 = vpop.f32.mrb[0].mxu0
    %v523 = vadd.f32 0.0, %v522
    %v524 = vpop.f32.mrb[0].mxu0
    %525 = vmatprep.mubr.f32.mxu0 0.0
    %526 = vmatmul.mubr.f32.gmra.mrb[0].mxu0 %v194
    %v527 = vpop.f32.mrb[0].mxu0
    %v528 = vadd.f32 0.0, %v527
    %v529 = vpop.f32.mrb[0].mxu0
    %530 = vmatprep.mubr.f32.mxu0 0.0
    %531 = vmatmul.mubr.f32.gmra.mrb[0].mxu0 %v197
    %v532 = vpop.f32.mrb[0].mxu0
    %v533 = vadd.f32 0.0, %v532
    %v534 = vpop.f32.mrb[0].mxu0
    %535 = vmatprep.mubr.f32.mxu0 0.0
    %536 = vmatmul.mubr.f32.gmra.mrb[0].mxu0 %v200
    %v537 = vpop.f32.mrb[0].mxu0
    %v538 = vadd.f32 0.0, %v537
    %v539 = vpop.f32.mrb[0].mxu0
    %540 = vmatprep.mubr.f32.mxu0 0.0
    %541 = vmatmul.mubr.f32.gmra.mrb[0].mxu0 %v203
    %v542 = vpop.f32.mrb[0].mxu0
    %v543 = vadd.f32 0.0, %v542
    %v544 = vpop.f32.mrb[0].mxu0
    %545 = vmatprep.mubr.f32.mxu0 0.0
    %546 = vmatmul.mubr.f32.gmra.mrb[0].mxu0 %v206
    %v547 = vpop.f32.mrb[0].mxu0
    %v548 = vadd.f32 0.0, %v547
    %v549 = vpop.f32.mrb[0].mxu0
    %550 = vmatprep.mubr.f32.mxu0 0.0
    %551 = vmatmul.mubr.f32.gmra.mrb[0].mxu0 %v209
    %v552 = vpop.f32.mrb[0].mxu0
    %v553 = vadd.f32 0.0, %v552
    %v554 = vpop.f32.mrb[0].mxu0
    %555 = vmatprep.mubr.f32.mxu0 0.0
    %556 = vmatmul.mubr.f32.gmra.mrb[0].mxu0 %v212
    %v557 = vpop.f32.mrb[0].mxu0
    %v558 = vadd.f32 0.0, %v557
    %v559 = vpop.f32.mrb[0].mxu0
    %560 = vmatprep.mubr.f32.mxu0 0.0
    %561 = vmatmul.mubr.f32.gmra.mrb[0].mxu0 %v215
    %v562 = vpop.f32.mrb[0].mxu0
    %v563 = vadd.f32 0.0, %v562
    %v564 = vpop.f32.mrb[0].mxu0
    %565 = vmatprep.mubr.f32.mxu0 0.0
    %566 = vmatmul.mubr.f32.gmra.mrb[0].mxu0 %v218
    %v567 = vpop.f32.mrb[0].mxu0
    %v568 = vadd.f32 0.0, %v567
    %v569 = vpop.f32.mrb[0].mxu0
    %570 = vmatprep.mubr.f32.mxu0 0.0
    %571 = vmatmul.mubr.f32.gmra.mrb[0].mxu0 %v221
    %v572 = vpop.f32.mrb[0].mxu0
    %v573 = vadd.f32 0.0, %v572
    %v574 = vpop.f32.mrb[0].mxu0
    %575 = vmatprep.mubr.f32.mxu0 0.0
    %576 = vmatmul.mubr.f32.gmra.mrb[0].mxu0 %v224
    %v577 = vpop.f32.mrb[0].mxu0
    %v578 = vadd.f32 0.0, %v577
    %v579 = vpop.f32.mrb[0].mxu0
    %580 = vmatprep.mubr.f32.mxu0 0.0
    %581 = vmatmul.mubr.f32.gmra.mrb[0].mxu0 %v227
    %v582 = vpop.f32.mrb[0].mxu0
    %v583 = vadd.f32 0.0, %v582
    %v584 = vpop.f32.mrb[0].mxu0
    %585 = vmatprep.mubr.f32.mxu0 0.0
    %586 = vmatmul.mubr.f32.gmra.mrb[0].mxu0 %v230
    %v587 = vpop.f32.mrb[0].mxu0
    %v588 = vadd.f32 0.0, %v587
    %v589 = vpop.f32.mrb[0].mxu0
    %590 = vmatprep.mubr.f32.mxu0 0.0
    %591 = vmatmul.mubr.f32.gmra.mrb[0].mxu0 %v233
    %v592 = vpop.f32.mrb[0].mxu0
    %v593 = vadd.f32 0.0, %v592
    %v594 = vpop.f32.mrb[0].mxu0
    %595 = vmatprep.mubr.f32.mxu0 0.0
    %596 = vmatmul.mubr.f32.gmra.mrb[0].mxu0 %v236
    %v597 = vpop.f32.mrb[0].mxu0
    %v598 = vadd.f32 0.0, %v597
    %v599 = vpop.f32.mrb[0].mxu0
    %600 = vmatprep.mubr.f32.mxu0 0.0
    %601 = vmatmul.mubr.f32.gmra.mrb[0].mxu0 %v239
    %v602 = vpop.f32.mrb[0].mxu0
    %v603 = vadd.f32 0.0, %v602
    %v604 = vpop.f32.mrb[0].mxu0
    %605 = vmatprep.mubr.f32.mxu0 0.0
    %606 = vmatmul.mubr.f32.gmra.mrb[0].mxu0 %v242
    %v607 = vpop.f32.mrb[0].mxu0
    %v608 = vadd.f32 0.0, %v607
    %v609 = vpop.f32.mrb[0].mxu0
    %610 = vmatprep.mubr.f32.mxu0 0.0
    %611 = vmatmul.mubr.f32.gmra.mrb[0].mxu0 %v245
    %v612 = vpop.f32.mrb[0].mxu0
    %v613 = vadd.f32 0.0, %v612
    %v614 = vpop.f32.mrb[0].mxu0
    %615 = vmatprep.mubr.f32.mxu0 0.0
    %616 = vmatmul.mubr.f32.gmra.mrb[0].mxu0 %v248
    %v617 = vpop.f32.mrb[0].mxu0
    %v618 = vadd.f32 0.0, %v617
    %v619 = vpop.f32.mrb[0].mxu0
    %620 = vmatprep.mubr.f32.mxu0 0.0
    %621 = vmatmul.mubr.f32.gmra.mrb[0].mxu0 %v251
    %v622 = vpop.f32.mrb[0].mxu0
    %v623 = vadd.f32 0.0, %v622
    %v624 = vpop.f32.mrb[0].mxu0
    %625 = vmatprep.mubr.f32.mxu0 0.0
    %626 = vmatmul.mubr.f32.gmra.mrb[0].mxu0 %v254
    %v627 = vpop.f32.mrb[0].mxu0
    %v628 = vadd.f32 0.0, %v627
    %v629 = vpop.f32.mrb[0].mxu0
    %630 = vmatprep.mubr.f32.mxu0 0.0
    %631 = vmatmul.mubr.f32.gmra.mrb[0].mxu0 %v257
    %v632 = vpop.f32.mrb[0].mxu0
    %v633 = vadd.f32 0.0, %v632
    %v634 = vpop.f32.mrb[0].mxu0
    %635 = vmatprep.mubr.f32.mxu0 0.0
    %636 = vmatmul.mubr.f32.gmra.mrb[0].mxu0 %v260
    %v637 = vpop.f32.mrb[0].mxu0
    %v638 = vadd.f32 0.0, %v637
    %v639 = vpop.f32.mrb[0].mxu0
    %640 = vmatprep.mubr.f32.mxu0 0.0
    %641 = vmatmul.mubr.f32.gmra.mrb[0].mxu0 %v263
    %v642 = vpop.f32.mrb[0].mxu0
    %v643 = vadd.f32 0.0, %v642
    %v644 = vpop.f32.mrb[0].mxu0
    %645 = vmatprep.mubr.f32.mxu0 0.0
    %646 = vmatmul.mubr.f32.gmra.mrb[0].mxu0 %v266
    %v647 = vpop.f32.mrb[0].mxu0
    %v648 = vadd.f32 0.0, %v647
    %v649 = vpop.f32.mrb[0].mxu0
    %650 = vmatprep.mubr.f32.mxu0 0.0
    %651 = vmatmul.mubr.f32.gmra.mrb[0].mxu0 %v269
    %v652 = vpop.f32.mrb[0].mxu0
    %v653 = vadd.f32 0.0, %v652
    %v654 = vpop.f32.mrb[0].mxu0
    %655 = vmatprep.mubr.f32.mxu0 0.0
    %656 = vmatmul.mubr.f32.gmra.mrb[0].mxu0 %v272
    %v657 = vpop.f32.mrb[0].mxu0
    %v658 = vadd.f32 0.0, %v657
    %v659 = vpop.f32.mrb[0].mxu0
    %660 = vmatprep.mubr.f32.mxu0 0.0
    %661 = vmatmul.mubr.f32.gmra.mrb[0].mxu0 %v275
    %v662 = vpop.f32.mrb[0].mxu0
    %v663 = vadd.f32 0.0, %v662
    %v664 = vpop.f32.mrb[0].mxu0
    %665 = vdwg.mxu0
    %v666 = vld [vmem:[#allocation2] sm:$0x1]
    %vm667 = vcmask 523264
    %v668 = vsel %vm667, %v348, 0.0
    %v669 = vsel %vm667, %v353, 0.0
    %v670 = vadd.f32 %v668, %v669
    %v671 = vsel %vm667, %v358, 0.0
    %v672 = vadd.f32 %v670, %v671
    %v673 = vsel %vm667, %v363, 0.0
    %v674 = vadd.f32 %v672, %v673
    %v675 = vsel %vm667, %v368, 0.0
    %v676 = vadd.f32 %v674, %v675
    %v677 = vsel %vm667, %v373, 0.0
    %v678 = vadd.f32 %v676, %v677
    %v679 = vsel %vm667, %v378, 0.0
    %v680 = vadd.f32 %v678, %v679
    %v681 = vsel %vm667, %v383, 0.0
    %v682 = vadd.f32 %v680, %v681
    %v683 = vsel %vm667, %v388, 0.0
    %v684 = vadd.f32 %v682, %v683
    %v685 = vsel %vm667, %v393, 0.0
    %v686 = vadd.f32 %v684, %v685
    %v687 = vsel %vm667, %v398, 0.0
    %v688 = vadd.f32 %v686, %v687
    %v689 = vsel %vm667, %v403, 0.0
    %v690 = vadd.f32 %v688, %v689
    %v691 = vsel %vm667, %v408, 0.0
    %v692 = vadd.f32 %v690, %v691
    %v693 = vsel %vm667, %v413, 0.0
    %v694 = vadd.f32 %v692, %v693
    %v695 = vsel %vm667, %v418, 0.0
    %v696 = vadd.f32 %v694, %v695
    %v697 = vsel %vm667, %v423, 0.0
    %v698 = vadd.f32 %v696, %v697
    %v699 = vsel %vm667, %v428, 0.0
    %v700 = vadd.f32 %v698, %v699
    %v701 = vsel %vm667, %v433, 0.0
    %v702 = vadd.f32 %v700, %v701
    %v703 = vsel %vm667, %v438, 0.0
    %v704 = vadd.f32 %v702, %v703
    %v705 = vsel %vm667, %v443, 0.0
    %v706 = vadd.f32 %v704, %v705
    %v707 = vsel %vm667, %v448, 0.0
    %v708 = vadd.f32 %v706, %v707
    %v709 = vsel %vm667, %v453, 0.0
    %v710 = vadd.f32 %v708, %v709
    %v711 = vsel %vm667, %v458, 0.0
    %v712 = vadd.f32 %v710, %v711
    %v713 = vsel %vm667, %v463, 0.0
    %v714 = vadd.f32 %v712, %v713
    %v715 = vsel %vm667, %v468, 0.0
    %v716 = vadd.f32 %v714, %v715
    %v717 = vsel %vm667, %v473, 0.0
    %v718 = vadd.f32 %v716, %v717
    %v719 = vsel %vm667, %v478, 0.0
    %v720 = vadd.f32 %v718, %v719
    %v721 = vsel %vm667, %v483, 0.0
    %v722 = vadd.f32 %v720, %v721
    %v723 = vsel %vm667, %v488, 0.0
    %v724 = vadd.f32 %v722, %v723
    %v725 = vsel %vm667, %v493, 0.0
    %v726 = vadd.f32 %v724, %v725
    %v727 = vsel %vm667, %v498, 0.0
    %v728 = vadd.f32 %v726, %v727
    %v729 = vsel %vm667, %v503, 0.0
    %v730 = vadd.f32 %v728, %v729
    %v731 = vsel %vm667, %v508, 0.0
    %v732 = vadd.f32 %v730, %v731
    %v733 = vsel %vm667, %v513, 0.0
    %v734 = vadd.f32 %v732, %v733
    %v735 = vsel %vm667, %v518, 0.0
    %v736 = vadd.f32 %v734, %v735
    %v737 = vsel %vm667, %v523, 0.0
    %v738 = vadd.f32 %v736, %v737
    %v739 = vsel %vm667, %v528, 0.0
    %v740 = vadd.f32 %v738, %v739
    %v741 = vsel %vm667, %v533, 0.0
    %v742 = vadd.f32 %v740, %v741
    %v743 = vsel %vm667, %v538, 0.0
    %v744 = vadd.f32 %v742, %v743
    %v745 = vsel %vm667, %v543, 0.0
    %v746 = vadd.f32 %v744, %v745
    %v747 = vsel %vm667, %v548, 0.0
    %v748 = vadd.f32 %v746, %v747
    %v749 = vsel %vm667, %v553, 0.0
    %v750 = vadd.f32 %v748, %v749
    %v751 = vsel %vm667, %v558, 0.0
    %v752 = vadd.f32 %v750, %v751
    %v753 = vsel %vm667, %v563, 0.0
    %v754 = vadd.f32 %v752, %v753
    %v755 = vsel %vm667, %v568, 0.0
    %v756 = vadd.f32 %v754, %v755
    %v757 = vsel %vm667, %v573, 0.0
    %v758 = vadd.f32 %v756, %v757
    %v759 = vsel %vm667, %v578, 0.0
    %v760 = vadd.f32 %v758, %v759
    %v761 = vsel %vm667, %v583, 0.0
    %v762 = vadd.f32 %v760, %v761
    %v763 = vsel %vm667, %v588, 0.0
    %v764 = vadd.f32 %v762, %v763
    %v765 = vsel %vm667, %v593, 0.0
    %v766 = vadd.f32 %v764, %v765
    %v767 = vsel %vm667, %v598, 0.0
    %v768 = vadd.f32 %v766, %v767
    %v769 = vsel %vm667, %v603, 0.0
    %v770 = vadd.f32 %v768, %v769
    %v771 = vsel %vm667, %v608, 0.0
    %v772 = vadd.f32 %v770, %v771
    %v773 = vsel %vm667, %v613, 0.0
    %v774 = vadd.f32 %v772, %v773
    %v775 = vsel %vm667, %v618, 0.0
    %v776 = vadd.f32 %v774, %v775
    %v777 = vsel %vm667, %v623, 0.0
    %v778 = vadd.f32 %v776, %v777
    %v779 = vsel %vm667, %v628, 0.0
    %v780 = vadd.f32 %v778, %v779
    %v781 = vsel %vm667, %v633, 0.0
    %v782 = vadd.f32 %v780, %v781
    %v783 = vsel %vm667, %v638, 0.0
    %v784 = vadd.f32 %v782, %v783
    %v785 = vsel %vm667, %v643, 0.0
    %v786 = vadd.f32 %v784, %v785
    %v787 = vsel %vm667, %v648, 0.0
    %v788 = vadd.f32 %v786, %v787
    %v789 = vsel %vm667, %v653, 0.0
    %v790 = vadd.f32 %v788, %v789
    %v791 = vsel %vm667, %v658, 0.0
    %v792 = vadd.f32 %v790, %v791
    %v793 = vsel %vm667, %v663, 0.0
    %v794 = vadd.f32 %v792, %v793
    %v795 = vrot.slane %v794, 4
    %v796 = vadd.f32 %v794, %v795
    %v797 = vrot.slane %v796, 2
    %v798 = vadd.f32 %v796, %v797
    %v799 = vrot.slane %v798, 1
    %v800 = vadd.f32 %v798, %v799
    %v801 = vadd.f32 %v666, %v800
    %vm802 = vcmask 516096
    %803 = vst.msk [vmem:[#allocation2] sm:$0x1] %vm802, %v801
    %v804 = vld [vmem:[#allocation2 + $0x1] sm:$0x1]
    %v805 = vmul.f32 %v348, %v348
    %v806 = vmul.f32 %v353, %v353
    %v807 = vmul.f32 %v358, %v358
    %v808 = vmul.f32 %v363, %v363
    %v809 = vmul.f32 %v368, %v368
    %v810 = vmul.f32 %v373, %v373
    %v811 = vmul.f32 %v378, %v378
    %v812 = vmul.f32 %v383, %v383
    %v813 = vmul.f32 %v388, %v388
    %v814 = vmul.f32 %v393, %v393
    %v815 = vmul.f32 %v398, %v398
    %v816 = vmul.f32 %v403, %v403
    %v817 = vmul.f32 %v408, %v408
    %v818 = vmul.f32 %v413, %v413
    %v819 = vmul.f32 %v418, %v418
    %v820 = vmul.f32 %v423, %v423
    %v821 = vmul.f32 %v428, %v428
    %v822 = vmul.f32 %v433, %v433
    %v823 = vmul.f32 %v438, %v438
    %v824 = vmul.f32 %v443, %v443
    %v825 = vmul.f32 %v448, %v448
    %v826 = vmul.f32 %v453, %v453
    %v827 = vmul.f32 %v458, %v458
    %v828 = vmul.f32 %v463, %v463
    %v829 = vmul.f32 %v468, %v468
    %v830 = vmul.f32 %v473, %v473
    %v831 = vmul.f32 %v478, %v478
    %v832 = vmul.f32 %v483, %v483
    %v833 = vmul.f32 %v488, %v488
    %v834 = vmul.f32 %v493, %v493
    %v835 = vmul.f32 %v498, %v498
    %v836 = vmul.f32 %v503, %v503
    %v837 = vmul.f32 %v508, %v508
    %v838 = vmul.f32 %v513, %v513
    %v839 = vmul.f32 %v518, %v518
    %v840 = vmul.f32 %v523, %v523
    %v841 = vmul.f32 %v528, %v528
    %v842 = vmul.f32 %v533, %v533
    %v843 = vmul.f32 %v538, %v538
    %v844 = vmul.f32 %v543, %v543
    %v845 = vmul.f32 %v548, %v548
    %v846 = vmul.f32 %v553, %v553
    %v847 = vmul.f32 %v558, %v558
    %v848 = vmul.f32 %v563, %v563
    %v849 = vmul.f32 %v568, %v568
    %v850 = vmul.f32 %v573, %v573
    %v851 = vmul.f32 %v578, %v578
    %v852 = vmul.f32 %v583, %v583
    %v853 = vmul.f32 %v588, %v588
    %v854 = vmul.f32 %v593, %v593
    %v855 = vmul.f32 %v598, %v598
    %v856 = vmul.f32 %v603, %v603
    %v857 = vmul.f32 %v608, %v608
    %v858 = vmul.f32 %v613, %v613
    %v859 = vmul.f32 %v618, %v618
    %v860 = vmul.f32 %v623, %v623
    %v861 = vmul.f32 %v628, %v628
    %v862 = vmul.f32 %v633, %v633
    %v863 = vmul.f32 %v638, %v638
    %v864 = vmul.f32 %v643, %v643
    %v865 = vmul.f32 %v648, %v648
    %v866 = vmul.f32 %v653, %v653
    %v867 = vmul.f32 %v658, %v658
    %v868 = vmul.f32 %v663, %v663
    %v869 = vsel %vm667, %v805, 0.0
    %v870 = vsel %vm667, %v806, 0.0
    %v871 = vadd.f32 %v869, %v870
    %v872 = vsel %vm667, %v807, 0.0
    %v873 = vadd.f32 %v871, %v872
    %v874 = vsel %vm667, %v808, 0.0
    %v875 = vadd.f32 %v873, %v874
    %v876 = vsel %vm667, %v809, 0.0
    %v877 = vadd.f32 %v875, %v876
    %v878 = vsel %vm667, %v810, 0.0
    %v879 = vadd.f32 %v877, %v878
    %v880 = vsel %vm667, %v811, 0.0
    %v881 = vadd.f32 %v879, %v880
    %v882 = vsel %vm667, %v812, 0.0
    %v883 = vadd.f32 %v881, %v882
    %v884 = vsel %vm667, %v813, 0.0
    %v885 = vadd.f32 %v883, %v884
    %v886 = vsel %vm667, %v814, 0.0
    %v887 = vadd.f32 %v885, %v886
    %v888 = vsel %vm667, %v815, 0.0
    %v889 = vadd.f32 %v887, %v888
    %v890 = vsel %vm667, %v816, 0.0
    %v891 = vadd.f32 %v889, %v890
    %v892 = vsel %vm667, %v817, 0.0
    %v893 = vadd.f32 %v891, %v892
    %v894 = vsel %vm667, %v818, 0.0
    %v895 = vadd.f32 %v893, %v894
    %v896 = vsel %vm667, %v819, 0.0
    %v897 = vadd.f32 %v895, %v896
    %v898 = vsel %vm667, %v820, 0.0
    %v899 = vadd.f32 %v897, %v898
    %v900 = vsel %vm667, %v821, 0.0
    %v901 = vadd.f32 %v899, %v900
    %v902 = vsel %vm667, %v822, 0.0
    %v903 = vadd.f32 %v901, %v902
    %v904 = vsel %vm667, %v823, 0.0
    %v905 = vadd.f32 %v903, %v904
    %v906 = vsel %vm667, %v824, 0.0
    %v907 = vadd.f32 %v905, %v906
    %v908 = vsel %vm667, %v825, 0.0
    %v909 = vadd.f32 %v907, %v908
    %v910 = vsel %vm667, %v826, 0.0
    %v911 = vadd.f32 %v909, %v910
    %v912 = vsel %vm667, %v827, 0.0
    %v913 = vadd.f32 %v911, %v912
    %v914 = vsel %vm667, %v828, 0.0
    %v915 = vadd.f32 %v913, %v914
    %v916 = vsel %vm667, %v829, 0.0
    %v917 = vadd.f32 %v915, %v916
    %v918 = vsel %vm667, %v830, 0.0
    %v919 = vadd.f32 %v917, %v918
    %v920 = vsel %vm667, %v831, 0.0
    %v921 = vadd.f32 %v919, %v920
    %v922 = vsel %vm667, %v832, 0.0
    %v923 = vadd.f32 %v921, %v922
    %v924 = vsel %vm667, %v833, 0.0
    %v925 = vadd.f32 %v923, %v924
    %v926 = vsel %vm667, %v834, 0.0
    %v927 = vadd.f32 %v925, %v926
    %v928 = vsel %vm667, %v835, 0.0
    %v929 = vadd.f32 %v927, %v928
    %v930 = vsel %vm667, %v836, 0.0
    %v931 = vadd.f32 %v929, %v930
    %v932 = vsel %vm667, %v837, 0.0
    %v933 = vadd.f32 %v931, %v932
    %v934 = vsel %vm667, %v838, 0.0
    %v935 = vadd.f32 %v933, %v934
    %v936 = vsel %vm667, %v839, 0.0
    %v937 = vadd.f32 %v935, %v936
    %v938 = vsel %vm667, %v840, 0.0
    %v939 = vadd.f32 %v937, %v938
    %v940 = vsel %vm667, %v841, 0.0
    %v941 = vadd.f32 %v939, %v940
    %v942 = vsel %vm667, %v842, 0.0
    %v943 = vadd.f32 %v941, %v942
    %v944 = vsel %vm667, %v843, 0.0
    %v945 = vadd.f32 %v943, %v944
    %v946 = vsel %vm667, %v844, 0.0
    %v947 = vadd.f32 %v945, %v946
    %v948 = vsel %vm667, %v845, 0.0
    %v949 = vadd.f32 %v947, %v948
    %v950 = vsel %vm667, %v846, 0.0
    %v951 = vadd.f32 %v949, %v950
    %v952 = vsel %vm667, %v847, 0.0
    %v953 = vadd.f32 %v951, %v952
    %v954 = vsel %vm667, %v848, 0.0
    %v955 = vadd.f32 %v953, %v954
    %v956 = vsel %vm667, %v849, 0.0
    %v957 = vadd.f32 %v955, %v956
    %v958 = vsel %vm667, %v850, 0.0
    %v959 = vadd.f32 %v957, %v958
    %v960 = vsel %vm667, %v851, 0.0
    %v961 = vadd.f32 %v959, %v960
    %v962 = vsel %vm667, %v852, 0.0
    %v963 = vadd.f32 %v961, %v962
    %v964 = vsel %vm667, %v853, 0.0
    %v965 = vadd.f32 %v963, %v964
    %v966 = vsel %vm667, %v854, 0.0
    %v967 = vadd.f32 %v965, %v966
    %v968 = vsel %vm667, %v855, 0.0
    %v969 = vadd.f32 %v967, %v968
    %v970 = vsel %vm667, %v856, 0.0
    %v971 = vadd.f32 %v969, %v970
    %v972 = vsel %vm667, %v857, 0.0
    %v973 = vadd.f32 %v971, %v972
    %v974 = vsel %vm667, %v858, 0.0
    %v975 = vadd.f32 %v973, %v974
    %v976 = vsel %vm667, %v859, 0.0
    %v977 = vadd.f32 %v975, %v976
    %v978 = vsel %vm667, %v860, 0.0
    %v979 = vadd.f32 %v977, %v978
    %v980 = vsel %vm667, %v861, 0.0
    %v981 = vadd.f32 %v979, %v980
    %v982 = vsel %vm667, %v862, 0.0
    %v983 = vadd.f32 %v981, %v982
    %v984 = vsel %vm667, %v863, 0.0
    %v985 = vadd.f32 %v983, %v984
    %v986 = vsel %vm667, %v864, 0.0
    %v987 = vadd.f32 %v985, %v986
    %v988 = vsel %vm667, %v865, 0.0
    %v989 = vadd.f32 %v987, %v988
    %v990 = vsel %vm667, %v866, 0.0
    %v991 = vadd.f32 %v989, %v990
    %v992 = vsel %vm667, %v867, 0.0
    %v993 = vadd.f32 %v991, %v992
    %v994 = vsel %vm667, %v868, 0.0
    %v995 = vadd.f32 %v993, %v994
    %v996 = vrot.slane %v995, 4
    %v997 = vadd.f32 %v995, %v996
    %v998 = vrot.slane %v997, 2
    %v999 = vadd.f32 %v997, %v998
    %v1000 = vrot.slane %v999, 1
    %v1001 = vadd.f32 %v999, %v1000
    %v1002 = vadd.f32 %v804, %v1001
    %1003 = vst.msk [vmem:[#allocation2 + $0x1] sm:$0x1] %vm802, %v1002
    // Predicated region
    $region14: #{tpu_custom_call.1} parent=1 // pred_check
      _
    $region15: #{tpu_custom_call.1} parent=1 // pred_check_branch
      %1005 = sbr.rel (0) target = $region17
    $region16: #{tpu_custom_call.1} parent=1 // pred_region
      %s1007 = ssub.s32 128, 128
      %1008 = vsyncadd [#allocation3], %s1007
      %s1010 = sshll.u32 [#allocation2], 4
      %s1011 = int_to_ptr.vmem [resolvable:$true] %s1010
      %1013 = dma.vmem_to_hbm [thread:$0]  %s1011, 128, %s2, [#allocation3]
    $region17: #{tpu_custom_call.1} parent=1 // pred_fallthru
      _
    // Predicated region
    $region18: #{tpu_custom_call.1} parent=1 // pred_check
      _
    $region19: #{tpu_custom_call.1} parent=1 // pred_check_branch
      %1015 = sbr.rel (0) target = $region21
    $region20: #{tpu_custom_call.1} parent=1 // pred_region
      %1016 = dma.done [#allocation3], 128
    $region21: #{tpu_custom_call.1} parent=1 // pred_fallthru
      _
    %1017 = vsyncpa [#allocation3], 1

</llo_original>
